<compile_context>
chip_gen: v6e
topology: v6e:2x2x1
jax: 0.10.0
libtpu: 0.0.40
codegen_flags: <defaults>
</compile_context>

<pallas_src>
import functools

import jax
import jax.numpy as jnp
from jax import lax
from jax.experimental import pallas as pl
from jax.experimental.pallas import tpu as pltpu

ALPHA = 0.1
POS_WEIGHT = 2.0

# Folded label-smoothing / pos_weight constants (pure mul+add chains on y):
_B      = 1.0 - 2.0 * ALPHA                    # 0.8
_C_1MT0 = 1.0 - ALPHA                          # (1 - t)   = _C_1MT0 - _B * y
_C_LW0  = 1.0 + (POS_WEIGHT - 1.0) * ALPHA     # loss wt   = _C_LW0  + _C_LW1 * y
_C_LW1  = (POS_WEIGHT - 1.0) * _B

SUBLANES = 16                      # bf16-pack-friendly sublane count
LANES = 128                        # lane width (multiple of 128)
ROW_ELEMS = SUBLANES * LANES       # 2048 elements per (16, 128) row
MAX_ROWS_PER_TILE = 512            # 512 * 2048 * 4 B = 4 MiB f32 per input tile
CHUNK_ROWS = 32                    # 32 rows (64K elems) per inner-loop chunk


def _loss_elems(x, y):
    """Per-element smoothed BCE-with-logits loss (stable softplus form), f32."""
    x = x.astype(jnp.float32)
    y = y.astype(jnp.float32)
    one_m_t = _C_1MT0 - _B * y
    lw = _C_LW0 + _C_LW1 * y
    sp = jnp.log1p(jnp.exp(-jnp.abs(x))) + jnp.maximum(-x, 0.0)
    return one_m_t * x + lw * sp


def _bce_smooth_kernel(pred_ref, true_ref, out_ref, *,
                       rows_per_tile, chunk_rows, valid_rows_last,
                       has_partial, last_o, last_i):
    o = pl.program_id(0)
    i = pl.program_id(1)

    # Output block index is constant over the inner axis -> output-resident accumulator.
    @pl.when(i == 0)
    def _():
        out_ref[...] = jnp.zeros_like(out_ref)

    n_full_chunks = rows_per_tile // chunk_rows
    chunk_rem = rows_per_tile - n_full_chunks * chunk_rows

    def chunk_partial(start, nrows, row_limit):
        x = pred_ref[pl.ds(start, nrows), :, :].astype(jnp.float32)
        y = true_ref[pl.ds(start, nrows), :, :].astype(jnp.float32)
        one_m_t = _C_1MT0 - _B * y
        lw = _C_LW0 + _C_LW1 * y
        sp = jnp.log1p(jnp.exp(-jnp.abs(x))) + jnp.maximum(-x, 0.0)
        loss = one_m_t * x + lw * sp
        if row_limit is not None:
            # Tail-tile only (trace-time gated): one row-iota vs. a scalar, select (not
            # multiply) so undefined padding rows (possibly NaN/Inf) are discarded.
            ridx = lax.broadcasted_iota(jnp.int32, loss.shape, 0) + start
            loss = jnp.where(ridx < row_limit, loss, 0.0)
        # Sum over the leading (non-layout) axis: pure VPU adds onto one vreg-shaped slab.
        return jnp.sum(loss, axis=0, keepdims=True)

    def accumulate(row_limit):
        def body(c, carry):
            start = pl.multiple_of(c * chunk_rows, chunk_rows)
            out_ref[...] += chunk_partial(start, chunk_rows, row_limit)
            return carry
        lax.fori_loop(0, n_full_chunks, body, 0)
        if chunk_rem:
            out_ref[...] += chunk_partial(n_full_chunks * chunk_rows, chunk_rem, row_limit)

    if has_partial:  # trace-time: only emitted when a row-partial tile exists
        is_last = jnp.logical_and(o == last_o, i == last_i)

        @pl.when(is_last)
        def _():
            accumulate(valid_rows_last)

        @pl.when(jnp.logical_not(is_last))
        def _():
            accumulate(None)
    else:
        accumulate(None)


def bce_with_logits_label_smoothing(y_pred, y_true):
    assert y_pred.shape == y_true.shape
    n = y_pred.size

    flat_p = y_pred.reshape(-1)
    flat_t = y_true.reshape(-1)

    n_rows = n // ROW_ELEMS          # whole (16, 128) rows
    n_main = n_rows * ROW_ELEMS
    rem = n - n_main                 # sub-row tail, < 2048 elements

    total = jnp.float32(0.0)

    if n_rows > 0:
        rows_per_tile = min(MAX_ROWS_PER_TILE, n_rows)
        n_tiles = pl.cdiv(n_rows, rows_per_tile)
        # 2-way outer split only when it covers the tile count exactly (no fully-OOB blocks).
        n_outer = 2 if (n_tiles >= 2 and n_tiles % 2 == 0) else 1
        n_inner = n_tiles // n_outer
        valid_rows_last = n_rows - (n_tiles - 1) * rows_per_tile
        has_partial = valid_rows_last != rows_per_tile

        # Zero-copy reshape when n is row-aligned; otherwise only the row-aligned prefix
        # is routed through the kernel (the tiny tail is summed in plain jnp below).
        main_p = flat_p[:n_main] if rem else flat_p
        main_t = flat_t[:n_main] if rem else flat_t
        pred3d = main_p.reshape(n_rows, SUBLANES, LANES)
        true3d = main_t.reshape(n_rows, SUBLANES, LANES)

        kernel = functools.partial(
            _bce_smooth_kernel,
            rows_per_tile=rows_per_tile,
            chunk_rows=min(CHUNK_ROWS, rows_per_tile),
            valid_rows_last=valid_rows_last,
            has_partial=has_partial,
            last_o=n_outer - 1,
            last_i=n_inner - 1,
        )

        in_block = (rows_per_tile, SUBLANES, LANES)
        partials = pl.pallas_call(
            kernel,
            out_shape=jax.ShapeDtypeStruct((n_outer, SUBLANES, LANES), jnp.float32),
            grid_spec=pltpu.PrefetchScalarGridSpec(
                num_scalar_prefetch=0,
                grid=(n_outer, n_inner),
                in_specs=[
                    pl.BlockSpec(in_block, lambda o, i: (o * n_inner + i, 0, 0)),
                    pl.BlockSpec(in_block, lambda o, i: (o * n_inner + i, 0, 0)),
                ],
                out_specs=pl.BlockSpec((1, SUBLANES, LANES), lambda o, i: (o, 0, 0)),
            ),
            compiler_params=pltpu.CompilerParams(
                dimension_semantics=("parallel", "arbitrary"),
                vmem_limit_bytes=32 * 1024 * 1024,
            ),
        )(pred3d, true3d)

        total = total + jnp.sum(partials)

    if rem:
        total = total + jnp.sum(_loss_elems(flat_p[n_main:], flat_t[n_main:]))

    # Single cross-lane reduction + 'mean' done once, outside the hot loop.
    return total / n


def _reference(y_pred, y_true):
    return _loss_elems(y_pred, y_true).mean()


if __name__ == "__main__":
    key = jax.random.PRNGKey(0)
    k1, k2 = jax.random.split(key)
    # NCHW inputs, as PyTorch would see them.
    B, C, H, W = 2, 4, 16, 16
    y_pred = jax.random.normal(k1, (B, C, H, W), dtype=jnp.float32)
    y_true = (jax.random.uniform(k2, (B, C, H, W)) > 0.5).astype(jnp.float32)

    fn = jax.jit(bce_with_logits_label_smoothing)
    out = jax.block_until_ready(fn(y_pred, y_true))

    ref = _reference(y_pred, y_true)
    assert jnp.allclose(out, ref, rtol=1e-5, atol=1e-5), (out, ref)
    print("KERNEL_OK")
</pallas_src>

<mosaic_0001>
module attributes {stable_mosaic.version = 11 : i64} {
  func.func @_bce_smooth_kernel(%arg0: i32, %arg1: i32, %arg2: memref<1x16x128xf32, #tpu.memory_space<vmem>>, %arg3: memref<1x16x128xf32, #tpu.memory_space<vmem>>, %arg4: memref<1x16x128xf32, #tpu.memory_space<vmem>>) attributes {dimension_semantics = [#tpu.dimension_semantics<parallel>, #tpu.dimension_semantics<arbitrary>], iteration_bounds = array<i64: 1, 1>, scalar_prefetch = 0 : i64, scratch_operands = 0 : i64, tpu.core_type = #tpu.core_type<tc>, window_params = [{transform_indices = @transform_0, window_bounds = array<i64: 1, 16, 128>}, {transform_indices = @transform_1, window_bounds = array<i64: 1, 16, 128>}, {transform_indices = @transform_2, window_bounds = array<i64: 1, 16, 128>}]} {
    %c0_i32 = arith.constant 0 : i32
    %0 = arith.cmpi eq, %arg1, %c0_i32 : i32
    %1 = arith.extui %0 : i1 to i32
    %c0_i32_0 = arith.constant 0 : i32
    %2 = arith.cmpi ne, %1, %c0_i32_0 : i32
    scf.if %2 {
      %cst_19 = arith.constant 0.000000e+00 : f32
      %35 = vector.broadcast %cst_19 : f32 to vector<1x16x128xf32>
      %c0_20 = arith.constant 0 : index
      %c0_21 = arith.constant 0 : index
      %c0_22 = arith.constant 0 : index
      %36 = vector.load %arg4[%c0_20, %c0_21, %c0_22] : memref<1x16x128xf32, #tpu.memory_space<vmem>>, vector<1x16x128xf32>
      tpu.vector_store %arg4[%c0_20, %c0_21, %c0_22], %35 {strides = array<i32>} : memref<1x16x128xf32, #tpu.memory_space<vmem>>, vector<1x16x128xf32>,
    } else {
    }
    %c0_i32_1 = arith.constant 0 : i32
    %c1_i32 = arith.constant 1 : i32
    %3 = arith.muli %c0_i32_1, %c1_i32 : i32
    %4 = tpu.assume_multiple %3, 1 : i32
    %c0 = arith.constant 0 : index
    %c0_2 = arith.constant 0 : index
    %c0_3 = arith.constant 0 : index
    %5 = vector.load %arg4[%c0, %c0_2, %c0_3] : memref<1x16x128xf32, #tpu.memory_space<vmem>>, vector<1x16x128xf32>
    %6 = arith.index_cast %4 : i32 to index
    %c0_4 = arith.constant 0 : index
    %c0_5 = arith.constant 0 : index
    %7 = vector.load %arg2[%6, %c0_4, %c0_5] : memref<1x16x128xf32, #tpu.memory_space<vmem>>, vector<1x16x128xf32>
    %8 = arith.index_cast %4 : i32 to index
    %c0_6 = arith.constant 0 : index
    %c0_7 = arith.constant 0 : index
    %9 = vector.load %arg3[%8, %c0_6, %c0_7] : memref<1x16x128xf32, #tpu.memory_space<vmem>>, vector<1x16x128xf32>
    %cst = arith.constant 8.000000e-01 : f32
    %10 = vector.broadcast %cst : f32 to vector<1x16x128xf32>
    %11 = arith.mulf %10, %9 : vector<1x16x128xf32>
    %cst_8 = arith.constant 0.899999976 : f32
    %12 = vector.broadcast %cst_8 : f32 to vector<1x16x128xf32>
    %13 = arith.subf %12, %11 : vector<1x16x128xf32>
    %cst_9 = arith.constant 8.000000e-01 : f32
    %14 = vector.broadcast %cst_9 : f32 to vector<1x16x128xf32>
    %15 = arith.mulf %14, %9 : vector<1x16x128xf32>
    %cst_10 = arith.constant 1.100000e+00 : f32
    %16 = vector.broadcast %cst_10 : f32 to vector<1x16x128xf32>
    %17 = arith.addf %16, %15 : vector<1x16x128xf32>
    %18 = math.absf %7 : vector<1x16x128xf32>
    %cst_11 = arith.constant 0.000000e+00 : f32
    %19 = vector.broadcast %cst_11 : f32 to vector<1x16x128xf32>
    %20 = arith.subf %19, %18 : vector<1x16x128xf32>
    %21 = math.exp %20 : vector<1x16x128xf32>
    %22 = math.log1p %21 : vector<1x16x128xf32>
    %cst_12 = arith.constant 0.000000e+00 : f32
    %23 = vector.broadcast %cst_12 : f32 to vector<1x16x128xf32>
    %24 = arith.subf %23, %7 : vector<1x16x128xf32>
    %cst_13 = arith.constant 0.000000e+00 : f32
    %25 = vector.broadcast %cst_13 : f32 to vector<1x16x128xf32>
    %26 = arith.maximumf %24, %25 : vector<1x16x128xf32>
    %27 = arith.addf %22, %26 : vector<1x16x128xf32>
    %28 = arith.mulf %13, %7 : vector<1x16x128xf32>
    %29 = arith.mulf %17, %27 : vector<1x16x128xf32>
    %30 = arith.addf %28, %29 : vector<1x16x128xf32>
    %cst_14 = arith.constant dense<0.000000e+00> : vector<16x128xf32>
    %31 = vector.multi_reduction <add>, %30, %cst_14 [0] : vector<1x16x128xf32> to vector<16x128xf32>
    %32 = vector.shape_cast %31 : vector<16x128xf32> to vector<1x16x128xf32>
    %33 = arith.addf %5, %32 : vector<1x16x128xf32>
    %c0_15 = arith.constant 0 : index
    %c0_16 = arith.constant 0 : index
    %c0_17 = arith.constant 0 : index
    %34 = vector.load %arg4[%c0_15, %c0_16, %c0_17] : memref<1x16x128xf32, #tpu.memory_space<vmem>>, vector<1x16x128xf32>
    tpu.vector_store %arg4[%c0_15, %c0_16, %c0_17], %33 {strides = array<i32>} : memref<1x16x128xf32, #tpu.memory_space<vmem>>, vector<1x16x128xf32>,
    %c1_i32_18 = arith.constant 1 : i32
    return
  }
  func.func @transform_0(%arg0: i32, %arg1: i32) -> (i32, i32, i32) {
    %c1_i32 = arith.constant 1 : i32
    %0 = arith.muli %arg0, %c1_i32 : i32
    %1 = arith.addi %0, %arg1 : i32
    %c0_i32 = arith.constant 0 : i32
    %c0_i32_0 = arith.constant 0 : i32
    %c0_i32_1 = arith.constant 0 : i32
    return %1, %c0_i32, %c0_i32_0 : i32, i32, i32
  }
  func.func @transform_1(%arg0: i32, %arg1: i32) -> (i32, i32, i32) {
    %c1_i32 = arith.constant 1 : i32
    %0 = arith.muli %arg0, %c1_i32 : i32
    %1 = arith.addi %0, %arg1 : i32
    %c0_i32 = arith.constant 0 : i32
    %c0_i32_0 = arith.constant 0 : i32
    %c0_i32_1 = arith.constant 0 : i32
    return %1, %c0_i32, %c0_i32_0 : i32, i32, i32
  }
  func.func @transform_2(%arg0: i32, %arg1: i32) -> (i32, i32, i32) {
    %c0_i32 = arith.constant 0 : i32
    %c0_i32_0 = arith.constant 0 : i32
    %c0_i32_1 = arith.constant 0 : i32
    return %arg0, %c0_i32, %c0_i32_0 : i32, i32, i32
  }
}

</mosaic_0001>

<llo_original>
// kernel: bce_with_logits_label_smoothing.1
$region0: #{bce_with_logits_label_smoothing.1}
  #allocation0 [shape = 'u32[]', space=smem, size = 0x4, offset = 0x4, fixed_abs, tag = 'smem constant byte address 0x4 - core index']
  #allocation1 [shape = 'u32[144,128]{1,0:T(1,128)}', space=vmem, size = 0x12000, scoped, tag = 'internal scratch']
  %s0 = inlined_call_operand.vmem [shape: f32[1,16,128], index: 0, kind: input, shape index: {}]
  %s1 = inlined_call_operand.vmem [shape: f32[1,16,128], index: 1, kind: input, shape index: {}]
  %s2 = inlined_call_operand.vmem [shape: f32[1,16,128], index: 2, kind: output, shape index: {}]
  %s3 = sld [smem:[#allocation0]]
  $region22: #{bce_with_logits_label_smoothing.1} parent=0
    _
  %s5 = ssub.s32 1, %s3
  %s6 = scalar_select 0, %s5, %s3
  // Predicated region
  $region2: #{bce_with_logits_label_smoothing.1} parent=0 // pred_check
    _
  $region3: #{bce_with_logits_label_smoothing.1} parent=0 // pred_check_branch
    %8 = sbr.rel (0) target = $region5
  $region4: #{bce_with_logits_label_smoothing.1} parent=0 // pred_region
    %s9 = sadd.s32 0, 0
    %p10 = scmp.lt.s32.totalorder %s9, 0
    %s11 = scalar_select %p10, %s9, 0
    %s12 = smul.addr %s11, 2
    %s13 = smul.addr %s12, 8
    %s14 = scalar_lea.vmem %s0, %s13
    %s15 = sadd.s32 0, 0
  $region5: #{bce_with_logits_label_smoothing.1} parent=0 // pred_fallthru
    _
  // Predicated region
  $region6: #{bce_with_logits_label_smoothing.1} parent=0 // pred_check
    _
  $region7: #{bce_with_logits_label_smoothing.1} parent=0 // pred_check_branch
    %17 = sbr.rel (0) target = $region9
  $region8: #{bce_with_logits_label_smoothing.1} parent=0 // pred_region
    %s18 = sadd.s32 0, 0
    %p19 = scmp.lt.s32.totalorder %s18, 0
    %s20 = scalar_select %p19, %s18, 0
    %s21 = smul.addr %s20, 2
    %s22 = smul.addr %s21, 8
    %s23 = scalar_lea.vmem %s1, %s22
    %s24 = sadd.s32 0, 0
  $region9: #{bce_with_logits_label_smoothing.1} parent=0 // pred_fallthru
    _
  %s25 = sadd.s32 0, 0
  %p26 = scmp.lt.s32.totalorder %s25, 0
  %s27 = scalar_select %p26, %s25, 0
  %s28 = smul.addr %s27, 2
  %s29 = smul.addr %s28, 8
  %s30 = scalar_lea.vmem %s0, %s29
  %s31 = sadd.s32 0, 0
  %p32 = scmp.lt.s32.totalorder %s31, 0
  %s33 = scalar_select %p32, %s31, 0
  %s34 = smul.addr %s33, 2
  %s35 = smul.addr %s34, 8
  %s36 = scalar_lea.vmem %s1, %s35
  %s37 = sadd.s32 0, 0
  %p38 = scmp.lt.s32.totalorder %s37, 0
  %s39 = scalar_select %p38, %s37, 0
  %s40 = smul.addr %s39, 2
  %s41 = smul.addr %s40, 8
  %s42 = scalar_lea.vmem %s0, %s41
  %s43 = sadd.s32 0, 0
  %s44 = sadd.s32 0, 0
  %p45 = scmp.lt.s32.totalorder %s44, 0
  %s46 = scalar_select %p45, %s44, 0
  %s47 = smul.addr %s46, 2
  %s48 = smul.addr %s47, 8
  %s49 = scalar_lea.vmem %s1, %s48
  %s50 = sadd.s32 0, 0
  %p51 = scmp.eq.s32.totalorder 0, 0
  // Predicated region
  $region10: #{bce_with_logits_label_smoothing.1} parent=0 // pred_check
    %p52 = pneg %p51
  $region11: #{bce_with_logits_label_smoothing.1} parent=0 // pred_check_branch
    %54 = sbr.rel (%p52) target = $region13
  $region12: #{bce_with_logits_label_smoothing.1} parent=0 // pred_region
    %55 = vst [vmem:[%s2] sm:$0xff] 0.0
    %56 = vst [vmem:[%s2 + $0x8] sm:$0xff] 0.0
  $region13: #{bce_with_logits_label_smoothing.1} parent=0 // pred_fallthru
    _
  %v57 = vld [vmem:[%s2] sm:$0xff]
  %v58 = vld [vmem:[%s2 + $0x8] sm:$0xff]
  %s59 = smul.u32 0, 16
  %s60 = scalar_lea.vmem %s42, %s59
  %v61 = vld [vmem:[%s60] sm:$0xff]
  %v62 = vld [vmem:[%s60 + $0x8] sm:$0xff]
  %s63 = scalar_lea.vmem %s49, %s59
  %v64 = vld [vmem:[%s63] sm:$0xff]
  %v65 = vld [vmem:[%s63 + $0x8] sm:$0xff]
  %v66 = vmul.f32 %v64, 0.8
  %v67 = vmul.f32 %v65, 0.8
  %v68 = vsub.f32 0.9, %v66
  %v69 = vsub.f32 0.9, %v67
  %v70 = vadd.f32 %v66, 1.1
  %v71 = vadd.f32 %v67, 1.1
  %v72 = vand.u32 2147483647, %v61
  %v73 = vand.u32 2147483647, %v62
  %v74 = vsub.f32 0.0, %v72
  %v75 = vsub.f32 0.0, %v73
  %v76 = vmul.f32 %v74, 1.442695
  %v77 = vpow.pop %v76
  %v78 = vmul.f32 %v75, 1.442695
  %v79 = vpow.pop %v78
  %v80 = vadd.f32 %v77, 1.0
  %v81 = vlog2.pop %v80
  %v82 = vmul.f32 %v81, 0.6931472
  %v83 = vmul.f32 -0.5, %v77
  %v84 = vadd.f32 %v83, 1.0
  %v85 = vmul.f32 %v84, %v77
  %v86 = vand.u32 2147483647, %v77
  %vm87 = vcmp.lt.f32.partialorder %v86, 0.0004427343
  %v88 = vsel %vm87, %v85, %v82
  %v89 = vadd.f32 %v79, 1.0
  %v90 = vlog2.pop %v89
  %v91 = vmul.f32 %v90, 0.6931472
  %v92 = vmul.f32 -0.5, %v79
  %v93 = vadd.f32 %v92, 1.0
  %v94 = vmul.f32 %v93, %v79
  %v95 = vand.u32 2147483647, %v79
  %vm96 = vcmp.lt.f32.partialorder %v95, 0.0004427343
  %v97 = vsel %vm96, %v94, %v91
  %v98 = vsub.f32 0.0, %v61
  %v99 = vsub.f32 0.0, %v62
  %v100 = vmax.f32 %v98, 0.0
  %v101 = vmax.f32 %v99, 0.0
  %v102 = vadd.f32 %v88, %v100
  %v103 = vadd.f32 %v97, %v101
  %v104 = vmul.f32 %v68, %v61
  %v105 = vmul.f32 %v69, %v62
  %v106 = vmul.f32 %v70, %v102
  %v107 = vmul.f32 %v71, %v103
  %v108 = vadd.f32 %v104, %v106
  %v109 = vadd.f32 %v105, %v107
  %v110 = vadd.f32 %v108, 0.0
  %v111 = vadd.f32 %v109, 0.0
  %v112 = vadd.f32 %v57, %v110
  %v113 = vadd.f32 %v58, %v111
  %114 = vst [vmem:[%s2] sm:$0xff] %v112
  %115 = vst [vmem:[%s2 + $0x8] sm:$0xff] %v113
  // Predicated region
  $region14: #{bce_with_logits_label_smoothing.1} parent=0 // pred_check
    _
  $region15: #{bce_with_logits_label_smoothing.1} parent=0 // pred_check_branch
    %117 = sbr.rel (0) target = $region17
  $region16: #{bce_with_logits_label_smoothing.1} parent=0 // pred_region
    _
  $region17: #{bce_with_logits_label_smoothing.1} parent=0 // pred_fallthru
    _
  // Predicated region
  $region18: #{bce_with_logits_label_smoothing.1} parent=0 // pred_check
    _
  $region19: #{bce_with_logits_label_smoothing.1} parent=0 // pred_check_branch
    %119 = sbr.rel (0) target = $region21
  $region20: #{bce_with_logits_label_smoothing.1} parent=0 // pred_region
    _
  $region21: #{bce_with_logits_label_smoothing.1} parent=0 // pred_fallthru
    _

</llo_original>
